<compile_context>
chip_gen: v7x
topology: tpu7x:2x2x1
jax: 0.10.0
libtpu: 0.0.40
codegen_flags: <defaults>
</compile_context>

<pallas_src>
import functools

import jax
import jax.numpy as jnp
from jax.experimental import pallas as pl
from jax.experimental.pallas import tpu as pltpu


def _snorm_kernel(x_ref, gamma_ref, beta_ref, o_ref, *, n_nodes, t_len):
    """One block.  x_ref/o_ref: (Sb, N*T); gamma_ref/beta_ref: (Sb, 1) f32."""
    f32 = jnp.float32
    nt = n_nodes * t_len

    x = x_ref[...].astype(f32)                                        # (Sb, NT)

    # 0/1 selection matrices mapping flattened lane index j = n*T + t to its time
    # class t.  The strided-over-N reduction and the broadcast back become MXU
    # matmuls (MXU is otherwise idle here).  Rebuilt per grid step: a few hundred
    # VPU cycles, negligible next to the block's HBM time.
    j_r = jax.lax.broadcasted_iota(jnp.int32, (nt, t_len), 0)
    t_c = jax.lax.broadcasted_iota(jnp.int32, (nt, t_len), 1)
    sel = jnp.where(j_r % t_len == t_c, f32(1.0), f32(0.0))           # (NT, T)
    t_r = jax.lax.broadcasted_iota(jnp.int32, (t_len, nt), 0)
    j_c = jax.lax.broadcasted_iota(jnp.int32, (t_len, nt), 1)
    sel_t = jnp.where(j_c % t_len == t_r, f32(1.0), f32(0.0))         # (T, NT)

    dot = functools.partial(jnp.dot, preferred_element_type=f32)

    # Mean over the node axis, per (slab, t), then broadcast back over lanes.
    mean_t = dot(x, sel) * f32(1.0 / n_nodes)                         # (Sb, T)
    mean_full = dot(mean_t, sel_t)                                    # (Sb, NT)
    diff = x - mean_full

    # Unbiased variance (ddof=1), matching torch.var(unbiased=True).
    # n_nodes == 1 yields NaN, same as torch (shape-static, decided at trace time).
    inv_nm1 = f32(1.0 / (n_nodes - 1)) if n_nodes > 1 else f32(jnp.nan)
    var_t = dot(diff * diff, sel) * inv_nm1                           # (Sb, T)

    # Fused affine: scale = gamma * rsqrt(var + eps); one block-sized FMA feeds the store.
    scale_t = jax.lax.rsqrt(var_t + f32(1e-5)) * gamma_ref[...]       # (Sb,T) * (Sb,1)
    scale_full = dot(scale_t, sel_t)                                  # (Sb, NT)
    o_ref[...] = (diff * scale_full + beta_ref[...]).astype(o_ref.dtype)


def _select_tiling(slabs, nt, t_len, itemsize):
    """Pick slab rows per block (Sb) and a VMEM budget from the real footprint."""
    try:
        info = pltpu.get_tpu_info()
        vmem_cap = int(getattr(info, "vmem_capacity_bytes", 64 * 1024 * 1024))
    except Exception:
        vmem_cap = 64 * 1024 * 1024                # assume smallest (v7x per-core VMEM)
    big_vmem = vmem_cap >= 100 * 1024 * 1024       # v5e/v6e = 128 MiB, v7x = 64 MiB

    # Bytes per slab row: double-buffered in+out at the I/O dtype plus the in-kernel
    # f32 working set (x, diff, mean_full/scale_full, pre-cast out, ...).
    row_io = nt * itemsize * 2 * 2
    row_work = nt * 4 * 6
    row_bytes = row_io + row_work
    target = (6 if big_vmem else 2) * 1024 * 1024  # bigger blocks on 128 MiB parts
    sb = max(1, target // row_bytes)

    # Keep >= 2 grid steps when possible so both v7x TensorCores get work
    # (dimension_semantics=("parallel",) shards the grid across cores).
    if slabs >= 2:
        sb = min(sb, pl.cdiv(slabs, 2))

    # (8,128) rule: the second-minor block dim must be a multiple of the native
    # sublane tile (8 for 4-byte, 16 for 2-byte, 32 for 1-byte dtypes) or the full dim.
    sub = 8 * max(1, 4 // max(1, itemsize))
    if sb >= slabs:
        sb = slabs
    else:
        sb = max(sub, (sb // sub) * sub)
        if sb >= slabs:
            sb = slabs

    # VMEM limit from the actual footprint (+ padded selection matrices & slack),
    # clamped below physical capacity so double-buffering survives on v7x's 64 MiB.
    sel_vmem = nt * 4 * (128 + 2 * max(8, t_len))
    need = sb * row_bytes + 2 * sel_vmem + (2 << 20)
    vmem_limit = int(min(max(need, 16 << 20), (vmem_cap * 3) // 4))
    return sb, vmem_limit


def snorm(x, gamma, beta):
    """SNorm forward.  x: (B, C, N, T); gamma, beta: (C,)."""
    B, C, N, T = x.shape
    nt = N * T
    slabs = B * C

    # Pure (free) reshape: each (b, c) slab's (N, T) plane is one contiguous,
    # lane-dense row of length N*T.  No HBM transpose on either side of the kernel.
    x2 = x.reshape(slabs, nt)

    # Per-slab affine scalars: O(B*C) bytes, not O(B*C * lanes).
    gamma2 = jnp.broadcast_to(
        gamma.astype(jnp.float32).reshape(1, C), (B, C)).reshape(slabs, 1)
    beta2 = jnp.broadcast_to(
        beta.astype(jnp.float32).reshape(1, C), (B, C)).reshape(slabs, 1)

    itemsize = jnp.dtype(x.dtype).itemsize
    sb, vmem_limit = _select_tiling(slabs, nt, T, itemsize)
    grid = (pl.cdiv(slabs, sb),)  # last block may be partial; padding rows are
                                  # per-row independent and never written back.

    kernel = functools.partial(_snorm_kernel, n_nodes=N, t_len=T)
    out2 = pl.pallas_call(
        kernel,
        out_shape=jax.ShapeDtypeStruct((slabs, nt), x.dtype),
        grid=grid,
        in_specs=[
            pl.BlockSpec((sb, nt), lambda i: (i, 0)),
            pl.BlockSpec((sb, 1), lambda i: (i, 0)),
            pl.BlockSpec((sb, 1), lambda i: (i, 0)),
        ],
        out_specs=pl.BlockSpec((sb, nt), lambda i: (i, 0)),
        compiler_params=pltpu.CompilerParams(
            dimension_semantics=("parallel",),
            vmem_limit_bytes=vmem_limit,
        ),
    )(x2, gamma2, beta2)

    # TODO(synk): if a single (N*T) row is too large for the VMEM budget, a lane-tiled
    # two-pass variant (stats pass + normalize pass) would be needed; and for T >= 128
    # a natural-layout (B*C, N, T) kernel with a plain sublane reduce would avoid the
    # selection-matrix matmuls entirely.
    return out2.reshape(B, C, N, T)


def snorm_ref(x, gamma, beta):
    mean = jnp.mean(x, axis=2, keepdims=True)
    var = jnp.var(x, axis=2, keepdims=True, ddof=1)
    x_norm = (x - mean) / jnp.sqrt(var + 1e-5)
    return x_norm * gamma.reshape(1, -1, 1, 1) + beta.reshape(1, -1, 1, 1)


if __name__ == "__main__":
    B, C, N, T = 2, 4, 16, 16
    key = jax.random.PRNGKey(0)
    kx, kg, kb = jax.random.split(key, 3)

    x = jax.random.normal(kx, (B, C, N, T), dtype=jnp.float32)
    # nn.Parameter(ones / zeros) plus a small perturbation so the affine is exercised.
    gamma = jnp.ones((C,), jnp.float32) + 0.1 * jax.random.normal(kg, (C,), jnp.float32)
    beta = jnp.zeros((C,), jnp.float32) + 0.1 * jax.random.normal(kb, (C,), jnp.float32)

    out = jax.jit(snorm)(x, gamma, beta)
    jax.block_until_ready(out)

    ref = snorm_ref(x, gamma, beta)
    assert out.shape == ref.shape and out.dtype == ref.dtype
    assert jnp.allclose(out, ref, atol=2e-5, rtol=2e-5), "mismatch vs reference"
    print("KERNEL_OK")
</pallas_src>

<mosaic_0001>
module attributes {stable_mosaic.version = 11 : i64} {
  func.func @_snorm_kernel(%arg0: i32, %arg1: memref<8x256xf32, #tpu.memory_space<vmem>>, %arg2: memref<8x1xf32, #tpu.memory_space<vmem>>, %arg3: memref<8x1xf32, #tpu.memory_space<vmem>>, %arg4: memref<8x256xf32, #tpu.memory_space<vmem>>) attributes {dimension_semantics = [#tpu.dimension_semantics<parallel>], iteration_bounds = array<i64: 1>, scalar_prefetch = 0 : i64, scratch_operands = 0 : i64, tpu.core_type = #tpu.core_type<tc>, window_params = [{transform_indices = @transform_0, window_bounds = array<i64: 8, 256>}, {transform_indices = @transform_1, window_bounds = array<i64: 8, 1>}, {transform_indices = @transform_2, window_bounds = array<i64: 8, 1>}, {transform_indices = @transform_3, window_bounds = array<i64: 8, 256>}]} {
    %c0 = arith.constant 0 : index
    %c0_0 = arith.constant 0 : index
    %0 = vector.load %arg1[%c0, %c0_0] : memref<8x256xf32, #tpu.memory_space<vmem>>, vector<8x256xf32>
    %1 = tpu.iota {dimensions = array<i32: 0>} : vector<256x16xi32>
    %2 = tpu.iota {dimensions = array<i32: 1>} : vector<256x16xi32>
    %c16_i32 = arith.constant 16 : i32
    %c0_i32 = arith.constant 0 : i32
    %3 = arith.cmpi eq, %c16_i32, %c0_i32 : i32
    %c1_i32 = arith.constant 1 : i32
    %4 = arith.select %3, %c1_i32, %c16_i32 : i32
    %5 = vector.broadcast %4 : i32 to vector<256x16xi32>
    %6 = arith.remsi %1, %5 : vector<256x16xi32>
    %c0_i32_1 = arith.constant 0 : i32
    %7 = vector.broadcast %c0_i32_1 : i32 to vector<256x16xi32>
    %8 = arith.cmpi ne, %6, %7 : vector<256x16xi32>
    %c0_i32_2 = arith.constant 0 : i32
    %9 = vector.broadcast %c0_i32_2 : i32 to vector<256x16xi32>
    %10 = arith.cmpi slt, %6, %9 : vector<256x16xi32>
    %c0_i32_3 = arith.constant 0 : i32
    %11 = arith.cmpi slt, %4, %c0_i32_3 : i32
    %12 = vector.broadcast %11 : i1 to vector<256x16xi1>
    %13 = vector.broadcast %12 : vector<256x16xi1> to vector<256x16xi1>
    %14 = arith.xori %10, %13 : vector<256x16xi1>
    %15 = arith.andi %14, %8 : vector<256x16xi1>
    %16 = vector.broadcast %4 : i32 to vector<256x16xi32>
    %17 = arith.addi %6, %16 : vector<256x16xi32>
    %18 = arith.select %15, %17, %6 : vector<256x16xi1>, vector<256x16xi32>
    %19 = arith.cmpi eq, %18, %2 : vector<256x16xi32>
    %cst = arith.constant 1.000000e+00 : f32
    %cst_4 = arith.constant 0.000000e+00 : f32
    %20 = vector.broadcast %cst : f32 to vector<256x16xf32>
    %21 = vector.broadcast %cst_4 : f32 to vector<256x16xf32>
    %22 = arith.select %19, %20, %21 : vector<256x16xi1>, vector<256x16xf32>
    %23 = tpu.iota {dimensions = array<i32: 0>} : vector<16x256xi32>
    %24 = tpu.iota {dimensions = array<i32: 1>} : vector<16x256xi32>
    %c16_i32_5 = arith.constant 16 : i32
    %c0_i32_6 = arith.constant 0 : i32
    %25 = arith.cmpi eq, %c16_i32_5, %c0_i32_6 : i32
    %c1_i32_7 = arith.constant 1 : i32
    %26 = arith.select %25, %c1_i32_7, %c16_i32_5 : i32
    %27 = vector.broadcast %26 : i32 to vector<16x256xi32>
    %28 = arith.remsi %24, %27 : vector<16x256xi32>
    %c0_i32_8 = arith.constant 0 : i32
    %29 = vector.broadcast %c0_i32_8 : i32 to vector<16x256xi32>
    %30 = arith.cmpi ne, %28, %29 : vector<16x256xi32>
    %c0_i32_9 = arith.constant 0 : i32
    %31 = vector.broadcast %c0_i32_9 : i32 to vector<16x256xi32>
    %32 = arith.cmpi slt, %28, %31 : vector<16x256xi32>
    %c0_i32_10 = arith.constant 0 : i32
    %33 = arith.cmpi slt, %26, %c0_i32_10 : i32
    %34 = vector.broadcast %33 : i1 to vector<16x256xi1>
    %35 = vector.broadcast %34 : vector<16x256xi1> to vector<16x256xi1>
    %36 = arith.xori %32, %35 : vector<16x256xi1>
    %37 = arith.andi %36, %30 : vector<16x256xi1>
    %38 = vector.broadcast %26 : i32 to vector<16x256xi32>
    %39 = arith.addi %28, %38 : vector<16x256xi32>
    %40 = arith.select %37, %39, %28 : vector<16x256xi1>, vector<16x256xi32>
    %41 = arith.cmpi eq, %40, %23 : vector<16x256xi32>
    %cst_11 = arith.constant 1.000000e+00 : f32
    %cst_12 = arith.constant 0.000000e+00 : f32
    %42 = vector.broadcast %cst_11 : f32 to vector<16x256xf32>
    %43 = vector.broadcast %cst_12 : f32 to vector<16x256xf32>
    %44 = arith.select %41, %42, %43 : vector<16x256xi1>, vector<16x256xf32>
    %cst_13 = arith.constant dense<0.000000e+00> : vector<8x16xf32>
    %45 = tpu.matmul %0, %22, %cst_13 {dimension_numbers = #tpu.dot_dimension_numbers<[1], [0], [0], [1], [0, 0, 1, 1], [], []>} : vector<8x256xf32>, vector<256x16xf32>, vector<8x16xf32> -> vector<8x16xf32>
    %cst_14 = arith.constant 6.250000e-02 : f32
    %46 = vector.broadcast %cst_14 : f32 to vector<8x16xf32>
    %47 = arith.mulf %45, %46 : vector<8x16xf32>
    %cst_15 = arith.constant dense<0.000000e+00> : vector<8x256xf32>
    %48 = tpu.matmul %47, %44, %cst_15 {dimension_numbers = #tpu.dot_dimension_numbers<[1], [0], [0], [1], [0, 0, 1, 1], [], []>} : vector<8x16xf32>, vector<16x256xf32>, vector<8x256xf32> -> vector<8x256xf32>
    %49 = arith.subf %0, %48 : vector<8x256xf32>
    %50 = arith.mulf %49, %49 : vector<8x256xf32>
    %cst_16 = arith.constant dense<0.000000e+00> : vector<8x16xf32>
    %51 = tpu.matmul %50, %22, %cst_16 {dimension_numbers = #tpu.dot_dimension_numbers<[1], [0], [0], [1], [0, 0, 1, 1], [], []>} : vector<8x256xf32>, vector<256x16xf32>, vector<8x16xf32> -> vector<8x16xf32>
    %cst_17 = arith.constant 0.0666666701 : f32
    %52 = vector.broadcast %cst_17 : f32 to vector<8x16xf32>
    %53 = arith.mulf %51, %52 : vector<8x16xf32>
    %cst_18 = arith.constant 9.99999974E-6 : f32
    %54 = vector.broadcast %cst_18 : f32 to vector<8x16xf32>
    %55 = arith.addf %53, %54 : vector<8x16xf32>
    %56 = math.rsqrt %55 : vector<8x16xf32>
    %c0_19 = arith.constant 0 : index
    %c0_20 = arith.constant 0 : index
    %57 = vector.load %arg2[%c0_19, %c0_20] : memref<8x1xf32, #tpu.memory_space<vmem>>, vector<8x1xf32>
    %58 = vector.broadcast %57 : vector<8x1xf32> to vector<8x16xf32>
    %59 = arith.mulf %56, %58 : vector<8x16xf32>
    %cst_21 = arith.constant dense<0.000000e+00> : vector<8x256xf32>
    %60 = tpu.matmul %59, %44, %cst_21 {dimension_numbers = #tpu.dot_dimension_numbers<[1], [0], [0], [1], [0, 0, 1, 1], [], []>} : vector<8x16xf32>, vector<16x256xf32>, vector<8x256xf32> -> vector<8x256xf32>
    %61 = arith.mulf %49, %60 : vector<8x256xf32>
    %c0_22 = arith.constant 0 : index
    %c0_23 = arith.constant 0 : index
    %62 = vector.load %arg3[%c0_22, %c0_23] : memref<8x1xf32, #tpu.memory_space<vmem>>, vector<8x1xf32>
    %63 = vector.broadcast %62 : vector<8x1xf32> to vector<8x256xf32>
    %64 = arith.addf %61, %63 : vector<8x256xf32>
    %c0_24 = arith.constant 0 : index
    %c0_25 = arith.constant 0 : index
    %65 = vector.load %arg4[%c0_24, %c0_25] : memref<8x256xf32, #tpu.memory_space<vmem>>, vector<8x256xf32>
    tpu.vector_store %arg4[%c0_24, %c0_25], %64 {strides = array<i32>} : memref<8x256xf32, #tpu.memory_space<vmem>>, vector<8x256xf32>,
    return
  }
  func.func @transform_0(%arg0: i32) -> (i32, i32) {
    %c0_i32 = arith.constant 0 : i32
    %c0_i32_0 = arith.constant 0 : i32
    return %arg0, %c0_i32 : i32, i32
  }
  func.func @transform_1(%arg0: i32) -> (i32, i32) {
    %c0_i32 = arith.constant 0 : i32
    %c0_i32_0 = arith.constant 0 : i32
    return %arg0, %c0_i32 : i32, i32
  }
  func.func @transform_2(%arg0: i32) -> (i32, i32) {
    %c0_i32 = arith.constant 0 : i32
    %c0_i32_0 = arith.constant 0 : i32
    return %arg0, %c0_i32 : i32, i32
  }
  func.func @transform_3(%arg0: i32) -> (i32, i32) {
    %c0_i32 = arith.constant 0 : i32
    %c0_i32_0 = arith.constant 0 : i32
    return %arg0, %c0_i32 : i32, i32
  }
}

</mosaic_0001>

<llo_original>
// kernel: snorm.1
$region0: #{snorm.1}
  #allocation0 [shape = 'u32[]', space=smem, size = 0x4, offset = 0x4, fixed_abs, tag = 'smem constant byte address 0x4 - core index']
  #allocation1 [shape = 'u32[144,128]{1,0:T(1,128)}', space=vmem, size = 0x12000, scoped, tag = 'internal scratch']
  %s0 = inlined_call_operand.vmem [shape: f32[8,256], index: 0, kind: input, shape index: {}]
  %s1 = inlined_call_operand.vmem [shape: f32[8,1], index: 1, kind: input, shape index: {}]
  %s2 = inlined_call_operand.vmem [shape: f32[8,1], index: 2, kind: input, shape index: {}]
  %s3 = inlined_call_operand.vmem [shape: f32[8,256], index: 3, kind: output, shape index: {}]
  %s4 = sld [smem:[#allocation0]]
  $region22: #{snorm.1} parent=0
    _
  %s6 = ssub.s32 1, %s4
  %s7 = scalar_select 0, %s6, %s4
  // Predicated region
  $region2: #{snorm.1} parent=0 // pred_check
    _
  $region3: #{snorm.1} parent=0 // pred_check_branch
    %9 = sbr.rel (0) target = $region5
  $region4: #{snorm.1} parent=0 // pred_region
    _
  $region5: #{snorm.1} parent=0 // pred_fallthru
    _
  // Predicated region
  $region6: #{snorm.1} parent=0 // pred_check
    _
  $region7: #{snorm.1} parent=0 // pred_check_branch
    %11 = sbr.rel (0) target = $region9
  $region8: #{snorm.1} parent=0 // pred_region
    _
  $region9: #{snorm.1} parent=0 // pred_fallthru
    _
  // Predicated region
  $region10: #{snorm.1} parent=0 // pred_check
    _
  $region11: #{snorm.1} parent=0 // pred_check_branch
    %13 = sbr.rel (0) target = $region13
  $region12: #{snorm.1} parent=0 // pred_region
    _
  $region13: #{snorm.1} parent=0 // pred_fallthru
    _
  %v14 = vld [vmem:[%s0] sm:$0xff]
  %v15 = vld [vmem:[%s0 + $0x8] sm:$0xff]
  %v16 = vlaneseq
  %v17 = vshrl.u32 %v16, 7
  %v18 = vadd.s32 %v17, 8
  %v19 = vadd.s32 %v17, 16
  %v20 = vadd.s32 %v17, 24
  %v21 = vadd.s32 %v17, 32
  %v22 = vadd.s32 %v17, 40
  %v23 = vadd.s32 %v17, 48
  %v24 = vadd.s32 %v17, 56
  %v25 = vadd.s32 %v17, 64
  %v26 = vadd.s32 %v17, 72
  %v27 = vadd.s32 %v17, 80
  %v28 = vadd.s32 %v17, 88
  %v29 = vadd.s32 %v17, 96
  %v30 = vadd.s32 %v17, 104
  %v31 = vadd.s32 %v17, 112
  %v32 = vadd.s32 %v17, 120
  %v33 = vadd.s32 %v17, 128
  %v34 = vadd.s32 %v17, 136
  %v35 = vadd.s32 %v17, 144
  %v36 = vadd.s32 %v17, 152
  %v37 = vadd.s32 %v17, 160
  %v38 = vadd.s32 %v17, 168
  %v39 = vadd.s32 %v17, 176
  %v40 = vadd.s32 %v17, 184
  %v41 = vadd.s32 %v17, 192
  %v42 = vadd.s32 %v17, 200
  %v43 = vadd.s32 %v17, 208
  %v44 = vadd.s32 %v17, 216
  %v45 = vadd.s32 %v17, 224
  %v46 = vadd.s32 %v17, 232
  %v47 = vadd.s32 %v17, 240
  %v48 = vadd.s32 %v17, 248
  %v49 = vlaneseq
  %v50 = vand.u32 %v49, 127
  %vm51 = vcmp.lt.s32.totalorder %v17, 0
  %v52 = vsub.s32 0, %v17
  %v53 = vsel %vm51, %v52, %v17
  %v54 = vshrl.u32 %v53, 4
  %v55 = vand.u32 %v53, 15
  %v56 = vsub.s32 0, %v55
  %v57 = vsel %vm51, %v56, %v55
  %vm58 = vcmp.lt.s32.totalorder %v18, 0
  %v59 = vsub.s32 0, %v18
  %v60 = vsel %vm58, %v59, %v18
  %v61 = vshrl.u32 %v60, 4
  %v62 = vand.u32 %v60, 15
  %v63 = vsub.s32 0, %v62
  %v64 = vsel %vm58, %v63, %v62
  %vm65 = vcmp.lt.s32.totalorder %v19, 0
  %v66 = vsub.s32 0, %v19
  %v67 = vsel %vm65, %v66, %v19
  %v68 = vshrl.u32 %v67, 4
  %v69 = vand.u32 %v67, 15
  %v70 = vsub.s32 0, %v69
  %v71 = vsel %vm65, %v70, %v69
  %vm72 = vcmp.lt.s32.totalorder %v20, 0
  %v73 = vsub.s32 0, %v20
  %v74 = vsel %vm72, %v73, %v20
  %v75 = vshrl.u32 %v74, 4
  %v76 = vand.u32 %v74, 15
  %v77 = vsub.s32 0, %v76
  %v78 = vsel %vm72, %v77, %v76
  %vm79 = vcmp.lt.s32.totalorder %v21, 0
  %v80 = vsub.s32 0, %v21
  %v81 = vsel %vm79, %v80, %v21
  %v82 = vshrl.u32 %v81, 4
  %v83 = vand.u32 %v81, 15
  %v84 = vsub.s32 0, %v83
  %v85 = vsel %vm79, %v84, %v83
  %vm86 = vcmp.lt.s32.totalorder %v22, 0
  %v87 = vsub.s32 0, %v22
  %v88 = vsel %vm86, %v87, %v22
  %v89 = vshrl.u32 %v88, 4
  %v90 = vand.u32 %v88, 15
  %v91 = vsub.s32 0, %v90
  %v92 = vsel %vm86, %v91, %v90
  %vm93 = vcmp.lt.s32.totalorder %v23, 0
  %v94 = vsub.s32 0, %v23
  %v95 = vsel %vm93, %v94, %v23
  %v96 = vshrl.u32 %v95, 4
  %v97 = vand.u32 %v95, 15
  %v98 = vsub.s32 0, %v97
  %v99 = vsel %vm93, %v98, %v97
  %vm100 = vcmp.lt.s32.totalorder %v24, 0
  %v101 = vsub.s32 0, %v24
  %v102 = vsel %vm100, %v101, %v24
  %v103 = vshrl.u32 %v102, 4
  %v104 = vand.u32 %v102, 15
  %v105 = vsub.s32 0, %v104
  %v106 = vsel %vm100, %v105, %v104
  %vm107 = vcmp.lt.s32.totalorder %v25, 0
  %v108 = vsub.s32 0, %v25
  %v109 = vsel %vm107, %v108, %v25
  %v110 = vshrl.u32 %v109, 4
  %v111 = vand.u32 %v109, 15
  %v112 = vsub.s32 0, %v111
  %v113 = vsel %vm107, %v112, %v111
  %vm114 = vcmp.lt.s32.totalorder %v26, 0
  %v115 = vsub.s32 0, %v26
  %v116 = vsel %vm114, %v115, %v26
  %v117 = vshrl.u32 %v116, 4
  %v118 = vand.u32 %v116, 15
  %v119 = vsub.s32 0, %v118
  %v120 = vsel %vm114, %v119, %v118
  %vm121 = vcmp.lt.s32.totalorder %v27, 0
  %v122 = vsub.s32 0, %v27
  %v123 = vsel %vm121, %v122, %v27
  %v124 = vshrl.u32 %v123, 4
  %v125 = vand.u32 %v123, 15
  %v126 = vsub.s32 0, %v125
  %v127 = vsel %vm121, %v126, %v125
  %vm128 = vcmp.lt.s32.totalorder %v28, 0
  %v129 = vsub.s32 0, %v28
  %v130 = vsel %vm128, %v129, %v28
  %v131 = vshrl.u32 %v130, 4
  %v132 = vand.u32 %v130, 15
  %v133 = vsub.s32 0, %v132
  %v134 = vsel %vm128, %v133, %v132
  %vm135 = vcmp.lt.s32.totalorder %v29, 0
  %v136 = vsub.s32 0, %v29
  %v137 = vsel %vm135, %v136, %v29
  %v138 = vshrl.u32 %v137, 4
  %v139 = vand.u32 %v137, 15
  %v140 = vsub.s32 0, %v139
  %v141 = vsel %vm135, %v140, %v139
  %vm142 = vcmp.lt.s32.totalorder %v30, 0
  %v143 = vsub.s32 0, %v30
  %v144 = vsel %vm142, %v143, %v30
  %v145 = vshrl.u32 %v144, 4
  %v146 = vand.u32 %v144, 15
  %v147 = vsub.s32 0, %v146
  %v148 = vsel %vm142, %v147, %v146
  %vm149 = vcmp.lt.s32.totalorder %v31, 0
  %v150 = vsub.s32 0, %v31
  %v151 = vsel %vm149, %v150, %v31
  %v152 = vshrl.u32 %v151, 4
  %v153 = vand.u32 %v151, 15
  %v154 = vsub.s32 0, %v153
  %v155 = vsel %vm149, %v154, %v153
  %vm156 = vcmp.lt.s32.totalorder %v32, 0
  %v157 = vsub.s32 0, %v32
  %v158 = vsel %vm156, %v157, %v32
  %v159 = vshrl.u32 %v158, 4
  %v160 = vand.u32 %v158, 15
  %v161 = vsub.s32 0, %v160
  %v162 = vsel %vm156, %v161, %v160
  %vm163 = vcmp.lt.s32.totalorder %v33, 0
  %v164 = vsub.s32 0, %v33
  %v165 = vsel %vm163, %v164, %v33
  %v166 = vshrl.u32 %v165, 4
  %v167 = vand.u32 %v165, 15
  %v168 = vsub.s32 0, %v167
  %v169 = vsel %vm163, %v168, %v167
  %vm170 = vcmp.lt.s32.totalorder %v34, 0
  %v171 = vsub.s32 0, %v34
  %v172 = vsel %vm170, %v171, %v34
  %v173 = vshrl.u32 %v172, 4
  %v174 = vand.u32 %v172, 15
  %v175 = vsub.s32 0, %v174
  %v176 = vsel %vm170, %v175, %v174
  %vm177 = vcmp.lt.s32.totalorder %v35, 0
  %v178 = vsub.s32 0, %v35
  %v179 = vsel %vm177, %v178, %v35
  %v180 = vshrl.u32 %v179, 4
  %v181 = vand.u32 %v179, 15
  %v182 = vsub.s32 0, %v181
  %v183 = vsel %vm177, %v182, %v181
  %vm184 = vcmp.lt.s32.totalorder %v36, 0
  %v185 = vsub.s32 0, %v36
  %v186 = vsel %vm184, %v185, %v36
  %v187 = vshrl.u32 %v186, 4
  %v188 = vand.u32 %v186, 15
  %v189 = vsub.s32 0, %v188
  %v190 = vsel %vm184, %v189, %v188
  %vm191 = vcmp.lt.s32.totalorder %v37, 0
  %v192 = vsub.s32 0, %v37
  %v193 = vsel %vm191, %v192, %v37
  %v194 = vshrl.u32 %v193, 4
  %v195 = vand.u32 %v193, 15
  %v196 = vsub.s32 0, %v195
  %v197 = vsel %vm191, %v196, %v195
  %vm198 = vcmp.lt.s32.totalorder %v38, 0
  %v199 = vsub.s32 0, %v38
  %v200 = vsel %vm198, %v199, %v38
  %v201 = vshrl.u32 %v200, 4
  %v202 = vand.u32 %v200, 15
  %v203 = vsub.s32 0, %v202
  %v204 = vsel %vm198, %v203, %v202
  %vm205 = vcmp.lt.s32.totalorder %v39, 0
  %v206 = vsub.s32 0, %v39
  %v207 = vsel %vm205, %v206, %v39
  %v208 = vshrl.u32 %v207, 4
  %v209 = vand.u32 %v207, 15
  %v210 = vsub.s32 0, %v209
  %v211 = vsel %vm205, %v210, %v209
  %vm212 = vcmp.lt.s32.totalorder %v40, 0
  %v213 = vsub.s32 0, %v40
  %v214 = vsel %vm212, %v213, %v40
  %v215 = vshrl.u32 %v214, 4
  %v216 = vand.u32 %v214, 15
  %v217 = vsub.s32 0, %v216
  %v218 = vsel %vm212, %v217, %v216
  %vm219 = vcmp.lt.s32.totalorder %v41, 0
  %v220 = vsub.s32 0, %v41
  %v221 = vsel %vm219, %v220, %v41
  %v222 = vshrl.u32 %v221, 4
  %v223 = vand.u32 %v221, 15
  %v224 = vsub.s32 0, %v223
  %v225 = vsel %vm219, %v224, %v223
  %vm226 = vcmp.lt.s32.totalorder %v42, 0
  %v227 = vsub.s32 0, %v42
  %v228 = vsel %vm226, %v227, %v42
  %v229 = vshrl.u32 %v228, 4
  %v230 = vand.u32 %v228, 15
  %v231 = vsub.s32 0, %v230
  %v232 = vsel %vm226, %v231, %v230
  %vm233 = vcmp.lt.s32.totalorder %v43, 0
  %v234 = vsub.s32 0, %v43
  %v235 = vsel %vm233, %v234, %v43
  %v236 = vshrl.u32 %v235, 4
  %v237 = vand.u32 %v235, 15
  %v238 = vsub.s32 0, %v237
  %v239 = vsel %vm233, %v238, %v237
  %vm240 = vcmp.lt.s32.totalorder %v44, 0
  %v241 = vsub.s32 0, %v44
  %v242 = vsel %vm240, %v241, %v44
  %v243 = vshrl.u32 %v242, 4
  %v244 = vand.u32 %v242, 15
  %v245 = vsub.s32 0, %v244
  %v246 = vsel %vm240, %v245, %v244
  %vm247 = vcmp.lt.s32.totalorder %v45, 0
  %v248 = vsub.s32 0, %v45
  %v249 = vsel %vm247, %v248, %v45
  %v250 = vshrl.u32 %v249, 4
  %v251 = vand.u32 %v249, 15
  %v252 = vsub.s32 0, %v251
  %v253 = vsel %vm247, %v252, %v251
  %vm254 = vcmp.lt.s32.totalorder %v46, 0
  %v255 = vsub.s32 0, %v46
  %v256 = vsel %vm254, %v255, %v46
  %v257 = vshrl.u32 %v256, 4
  %v258 = vand.u32 %v256, 15
  %v259 = vsub.s32 0, %v258
  %v260 = vsel %vm254, %v259, %v258
  %vm261 = vcmp.lt.s32.totalorder %v47, 0
  %v262 = vsub.s32 0, %v47
  %v263 = vsel %vm261, %v262, %v47
  %v264 = vshrl.u32 %v263, 4
  %v265 = vand.u32 %v263, 15
  %v266 = vsub.s32 0, %v265
  %v267 = vsel %vm261, %v266, %v265
  %vm268 = vcmp.lt.s32.totalorder %v48, 0
  %v269 = vsub.s32 0, %v48
  %v270 = vsel %vm268, %v269, %v48
  %v271 = vshrl.u32 %v270, 4
  %v272 = vand.u32 %v270, 15
  %v273 = vsub.s32 0, %v272
  %v274 = vsel %vm268, %v273, %v272
  %vm275 = vcmp.ne.s32.totalorder %v57, 0
  %vm276 = vcmp.ne.s32.totalorder %v64, 0
  %vm277 = vcmp.ne.s32.totalorder %v71, 0
  %vm278 = vcmp.ne.s32.totalorder %v78, 0
  %vm279 = vcmp.ne.s32.totalorder %v85, 0
  %vm280 = vcmp.ne.s32.totalorder %v92, 0
  %vm281 = vcmp.ne.s32.totalorder %v99, 0
  %vm282 = vcmp.ne.s32.totalorder %v106, 0
  %vm283 = vcmp.ne.s32.totalorder %v113, 0
  %vm284 = vcmp.ne.s32.totalorder %v120, 0
  %vm285 = vcmp.ne.s32.totalorder %v127, 0
  %vm286 = vcmp.ne.s32.totalorder %v134, 0
  %vm287 = vcmp.ne.s32.totalorder %v141, 0
  %vm288 = vcmp.ne.s32.totalorder %v148, 0
  %vm289 = vcmp.ne.s32.totalorder %v155, 0
  %vm290 = vcmp.ne.s32.totalorder %v162, 0
  %vm291 = vcmp.ne.s32.totalorder %v169, 0
  %vm292 = vcmp.ne.s32.totalorder %v176, 0
  %vm293 = vcmp.ne.s32.totalorder %v183, 0
  %vm294 = vcmp.ne.s32.totalorder %v190, 0
  %vm295 = vcmp.ne.s32.totalorder %v197, 0
  %vm296 = vcmp.ne.s32.totalorder %v204, 0
  %vm297 = vcmp.ne.s32.totalorder %v211, 0
  %vm298 = vcmp.ne.s32.totalorder %v218, 0
  %vm299 = vcmp.ne.s32.totalorder %v225, 0
  %vm300 = vcmp.ne.s32.totalorder %v232, 0
  %vm301 = vcmp.ne.s32.totalorder %v239, 0
  %vm302 = vcmp.ne.s32.totalorder %v246, 0
  %vm303 = vcmp.ne.s32.totalorder %v253, 0
  %vm304 = vcmp.ne.s32.totalorder %v260, 0
  %vm305 = vcmp.ne.s32.totalorder %v267, 0
  %vm306 = vcmp.ne.s32.totalorder %v274, 0
  %vm307 = vcmp.lt.s32.totalorder %v57, 0
  %vm308 = vcmp.lt.s32.totalorder %v64, 0
  %vm309 = vcmp.lt.s32.totalorder %v71, 0
  %vm310 = vcmp.lt.s32.totalorder %v78, 0
  %vm311 = vcmp.lt.s32.totalorder %v85, 0
  %vm312 = vcmp.lt.s32.totalorder %v92, 0
  %vm313 = vcmp.lt.s32.totalorder %v99, 0
  %vm314 = vcmp.lt.s32.totalorder %v106, 0
  %vm315 = vcmp.lt.s32.totalorder %v113, 0
  %vm316 = vcmp.lt.s32.totalorder %v120, 0
  %vm317 = vcmp.lt.s32.totalorder %v127, 0
  %vm318 = vcmp.lt.s32.totalorder %v134, 0
  %vm319 = vcmp.lt.s32.totalorder %v141, 0
  %vm320 = vcmp.lt.s32.totalorder %v148, 0
  %vm321 = vcmp.lt.s32.totalorder %v155, 0
  %vm322 = vcmp.lt.s32.totalorder %v162, 0
  %vm323 = vcmp.lt.s32.totalorder %v169, 0
  %vm324 = vcmp.lt.s32.totalorder %v176, 0
  %vm325 = vcmp.lt.s32.totalorder %v183, 0
  %vm326 = vcmp.lt.s32.totalorder %v190, 0
  %vm327 = vcmp.lt.s32.totalorder %v197, 0
  %vm328 = vcmp.lt.s32.totalorder %v204, 0
  %vm329 = vcmp.lt.s32.totalorder %v211, 0
  %vm330 = vcmp.lt.s32.totalorder %v218, 0
  %vm331 = vcmp.lt.s32.totalorder %v225, 0
  %vm332 = vcmp.lt.s32.totalorder %v232, 0
  %vm333 = vcmp.lt.s32.totalorder %v239, 0
  %vm334 = vcmp.lt.s32.totalorder %v246, 0
  %vm335 = vcmp.lt.s32.totalorder %v253, 0
  %vm336 = vcmp.lt.s32.totalorder %v260, 0
  %vm337 = vcmp.lt.s32.totalorder %v267, 0
  %vm338 = vcmp.lt.s32.totalorder %v274, 0
  %vm339 = vmand %vm307, %vm275
  %vm340 = vmand %vm308, %vm276
  %vm341 = vmand %vm309, %vm277
  %vm342 = vmand %vm310, %vm278
  %vm343 = vmand %vm311, %vm279
  %vm344 = vmand %vm312, %vm280
  %vm345 = vmand %vm313, %vm281
  %vm346 = vmand %vm314, %vm282
  %vm347 = vmand %vm315, %vm283
  %vm348 = vmand %vm316, %vm284
  %vm349 = vmand %vm317, %vm285
  %vm350 = vmand %vm318, %vm286
  %vm351 = vmand %vm319, %vm287
  %vm352 = vmand %vm320, %vm288
  %vm353 = vmand %vm321, %vm289
  %vm354 = vmand %vm322, %vm290
  %vm355 = vmand %vm323, %vm291
  %vm356 = vmand %vm324, %vm292
  %vm357 = vmand %vm325, %vm293
  %vm358 = vmand %vm326, %vm294
  %vm359 = vmand %vm327, %vm295
  %vm360 = vmand %vm328, %vm296
  %vm361 = vmand %vm329, %vm297
  %vm362 = vmand %vm330, %vm298
  %vm363 = vmand %vm331, %vm299
  %vm364 = vmand %vm332, %vm300
  %vm365 = vmand %vm333, %vm301
  %vm366 = vmand %vm334, %vm302
  %vm367 = vmand %vm335, %vm303
  %vm368 = vmand %vm336, %vm304
  %vm369 = vmand %vm337, %vm305
  %vm370 = vmand %vm338, %vm306
  %v371 = vadd.s32 %v57, 16
  %v372 = vadd.s32 %v64, 16
  %v373 = vadd.s32 %v71, 16
  %v374 = vadd.s32 %v78, 16
  %v375 = vadd.s32 %v85, 16
  %v376 = vadd.s32 %v92, 16
  %v377 = vadd.s32 %v99, 16
  %v378 = vadd.s32 %v106, 16
  %v379 = vadd.s32 %v113, 16
  %v380 = vadd.s32 %v120, 16
  %v381 = vadd.s32 %v127, 16
  %v382 = vadd.s32 %v134, 16
  %v383 = vadd.s32 %v141, 16
  %v384 = vadd.s32 %v148, 16
  %v385 = vadd.s32 %v155, 16
  %v386 = vadd.s32 %v162, 16
  %v387 = vadd.s32 %v169, 16
  %v388 = vadd.s32 %v176, 16
  %v389 = vadd.s32 %v183, 16
  %v390 = vadd.s32 %v190, 16
  %v391 = vadd.s32 %v197, 16
  %v392 = vadd.s32 %v204, 16
  %v393 = vadd.s32 %v211, 16
  %v394 = vadd.s32 %v218, 16
  %v395 = vadd.s32 %v225, 16
  %v396 = vadd.s32 %v232, 16
  %v397 = vadd.s32 %v239, 16
  %v398 = vadd.s32 %v246, 16
  %v399 = vadd.s32 %v253, 16
  %v400 = vadd.s32 %v260, 16
  %v401 = vadd.s32 %v267, 16
  %v402 = vadd.s32 %v274, 16
  %v403 = vsel %vm339, %v371, %v57
  %v404 = vsel %vm340, %v372, %v64
  %v405 = vsel %vm341, %v373, %v71
  %v406 = vsel %vm342, %v374, %v78
  %v407 = vsel %vm343, %v375, %v85
  %v408 = vsel %vm344, %v376, %v92
  %v409 = vsel %vm345, %v377, %v99
  %v410 = vsel %vm346, %v378, %v106
  %v411 = vsel %vm347, %v379, %v113
  %v412 = vsel %vm348, %v380, %v120
  %v413 = vsel %vm349, %v381, %v127
  %v414 = vsel %vm350, %v382, %v134
  %v415 = vsel %vm351, %v383, %v141
  %v416 = vsel %vm352, %v384, %v148
  %v417 = vsel %vm353, %v385, %v155
  %v418 = vsel %vm354, %v386, %v162
  %v419 = vsel %vm355, %v387, %v169
  %v420 = vsel %vm356, %v388, %v176
  %v421 = vsel %vm357, %v389, %v183
  %v422 = vsel %vm358, %v390, %v190
  %v423 = vsel %vm359, %v391, %v197
  %v424 = vsel %vm360, %v392, %v204
  %v425 = vsel %vm361, %v393, %v211
  %v426 = vsel %vm362, %v394, %v218
  %v427 = vsel %vm363, %v395, %v225
  %v428 = vsel %vm364, %v396, %v232
  %v429 = vsel %vm365, %v397, %v239
  %v430 = vsel %vm366, %v398, %v246
  %v431 = vsel %vm367, %v399, %v253
  %v432 = vsel %vm368, %v400, %v260
  %v433 = vsel %vm369, %v401, %v267
  %v434 = vsel %vm370, %v402, %v274
  %vm435 = vcmp.eq.s32.totalorder %v403, %v50
  %vm436 = vcmp.eq.s32.totalorder %v404, %v50
  %vm437 = vcmp.eq.s32.totalorder %v405, %v50
  %vm438 = vcmp.eq.s32.totalorder %v406, %v50
  %vm439 = vcmp.eq.s32.totalorder %v407, %v50
  %vm440 = vcmp.eq.s32.totalorder %v408, %v50
  %vm441 = vcmp.eq.s32.totalorder %v409, %v50
  %vm442 = vcmp.eq.s32.totalorder %v410, %v50
  %vm443 = vcmp.eq.s32.totalorder %v411, %v50
  %vm444 = vcmp.eq.s32.totalorder %v412, %v50
  %vm445 = vcmp.eq.s32.totalorder %v413, %v50
  %vm446 = vcmp.eq.s32.totalorder %v414, %v50
  %vm447 = vcmp.eq.s32.totalorder %v415, %v50
  %vm448 = vcmp.eq.s32.totalorder %v416, %v50
  %vm449 = vcmp.eq.s32.totalorder %v417, %v50
  %vm450 = vcmp.eq.s32.totalorder %v418, %v50
  %vm451 = vcmp.eq.s32.totalorder %v419, %v50
  %vm452 = vcmp.eq.s32.totalorder %v420, %v50
  %vm453 = vcmp.eq.s32.totalorder %v421, %v50
  %vm454 = vcmp.eq.s32.totalorder %v422, %v50
  %vm455 = vcmp.eq.s32.totalorder %v423, %v50
  %vm456 = vcmp.eq.s32.totalorder %v424, %v50
  %vm457 = vcmp.eq.s32.totalorder %v425, %v50
  %vm458 = vcmp.eq.s32.totalorder %v426, %v50
  %vm459 = vcmp.eq.s32.totalorder %v427, %v50
  %vm460 = vcmp.eq.s32.totalorder %v428, %v50
  %vm461 = vcmp.eq.s32.totalorder %v429, %v50
  %vm462 = vcmp.eq.s32.totalorder %v430, %v50
  %vm463 = vcmp.eq.s32.totalorder %v431, %v50
  %vm464 = vcmp.eq.s32.totalorder %v432, %v50
  %vm465 = vcmp.eq.s32.totalorder %v433, %v50
  %vm466 = vcmp.eq.s32.totalorder %v434, %v50
  %v467 = vsel %vm435, 1.0, 0.0
  %v468 = vsel %vm436, 1.0, 0.0
  %v469 = vsel %vm437, 1.0, 0.0
  %v470 = vsel %vm438, 1.0, 0.0
  %v471 = vsel %vm439, 1.0, 0.0
  %v472 = vsel %vm440, 1.0, 0.0
  %v473 = vsel %vm441, 1.0, 0.0
  %v474 = vsel %vm442, 1.0, 0.0
  %v475 = vsel %vm443, 1.0, 0.0
  %v476 = vsel %vm444, 1.0, 0.0
  %v477 = vsel %vm445, 1.0, 0.0
  %v478 = vsel %vm446, 1.0, 0.0
  %v479 = vsel %vm447, 1.0, 0.0
  %v480 = vsel %vm448, 1.0, 0.0
  %v481 = vsel %vm449, 1.0, 0.0
  %v482 = vsel %vm450, 1.0, 0.0
  %v483 = vsel %vm451, 1.0, 0.0
  %v484 = vsel %vm452, 1.0, 0.0
  %v485 = vsel %vm453, 1.0, 0.0
  %v486 = vsel %vm454, 1.0, 0.0
  %v487 = vsel %vm455, 1.0, 0.0
  %v488 = vsel %vm456, 1.0, 0.0
  %v489 = vsel %vm457, 1.0, 0.0
  %v490 = vsel %vm458, 1.0, 0.0
  %v491 = vsel %vm459, 1.0, 0.0
  %v492 = vsel %vm460, 1.0, 0.0
  %v493 = vsel %vm461, 1.0, 0.0
  %v494 = vsel %vm462, 1.0, 0.0
  %v495 = vsel %vm463, 1.0, 0.0
  %v496 = vsel %vm464, 1.0, 0.0
  %v497 = vsel %vm465, 1.0, 0.0
  %v498 = vsel %vm466, 1.0, 0.0
  %v499 = vadd.s32 %v50, 128
  %vm500 = vcmp.lt.s32.totalorder %v50, 0
  %v501 = vsub.s32 0, %v50
  %v502 = vsel %vm500, %v501, %v50
  %v503 = vshrl.u32 %v502, 4
  %v504 = vand.u32 %v502, 15
  %v505 = vsub.s32 0, %v504
  %v506 = vsel %vm500, %v505, %v504
  %vm507 = vcmp.lt.s32.totalorder %v499, 0
  %v508 = vsub.s32 0, %v499
  %v509 = vsel %vm507, %v508, %v499
  %v510 = vshrl.u32 %v509, 4
  %v511 = vand.u32 %v509, 15
  %v512 = vsub.s32 0, %v511
  %v513 = vsel %vm507, %v512, %v511
  %vm514 = vcmp.ne.s32.totalorder %v506, 0
  %vm515 = vcmp.ne.s32.totalorder %v513, 0
  %vm516 = vcmp.lt.s32.totalorder %v506, 0
  %vm517 = vcmp.lt.s32.totalorder %v513, 0
  %vm518 = vmand %vm516, %vm514
  %vm519 = vmand %vm517, %vm515
  %v520 = vadd.s32 %v506, 16
  %v521 = vadd.s32 %v513, 16
  %v522 = vsel %vm518, %v520, %v506
  %v523 = vsel %vm519, %v521, %v513
  %vm524 = vcmp.eq.s32.totalorder %v522, %v17
  %vm525 = vcmp.eq.s32.totalorder %v523, %v17
  %vm526 = vcmp.eq.s32.totalorder %v522, %v18
  %vm527 = vcmp.eq.s32.totalorder %v523, %v18
  %v528 = vsel %vm524, 1.0, 0.0
  %v529 = vsel %vm525, 1.0, 0.0
  %v530 = vsel %vm526, 1.0, 0.0
  %v531 = vsel %vm527, 1.0, 0.0
  %532 = vmatprep.subr.mxu0 0.0
  %533 = vmatpush1.msra.mxu0 %v467
  %534 = vmatprep.subr.mxu0 0.0
  %535 = vmatpush1.msra.mxu0 %v468
  %536 = vmatprep.subr.mxu0 0.0
  %537 = vmatpush1.msra.mxu0 %v469
  %538 = vmatprep.subr.mxu0 0.0
  %539 = vmatpush1.msra.mxu0 %v470
  %540 = vmatprep.subr.mxu0 0.0
  %541 = vmatpush1.msra.mxu0 %v471
  %542 = vmatprep.subr.mxu0 0.0
  %543 = vmatpush1.msra.mxu0 %v472
  %544 = vmatprep.subr.mxu0 0.0
  %545 = vmatpush1.msra.mxu0 %v473
  %546 = vmatprep.subr.mxu0 0.0
  %547 = vmatpush1.msra.mxu0 %v474
  %548 = vmatprep.subr.mxu0 0.0
  %549 = vmatpush1.msra.mxu0 %v475
  %550 = vmatprep.subr.mxu0 0.0
  %551 = vmatpush1.msra.mxu0 %v476
  %552 = vmatprep.subr.mxu0 0.0
  %553 = vmatpush1.msra.mxu0 %v477
  %554 = vmatprep.subr.mxu0 0.0
  %555 = vmatpush1.msra.mxu0 %v478
  %556 = vmatprep.subr.mxu0 0.0
  %557 = vmatpush1.msra.mxu0 %v479
  %558 = vmatprep.subr.mxu0 0.0
  %559 = vmatpush1.msra.mxu0 %v480
  %560 = vmatprep.subr.mxu0 0.0
  %561 = vmatpush1.msra.mxu0 %v481
  %562 = vmatprep.subr.mxu0 0.0
  %563 = vmatpush1.msra.mxu0 %v482
  %564 = vmatprep.subr.mxu0 0.0
  %565 = vmatpush1.msra.mxu0 %v483
  %566 = vmatprep.subr.mxu0 0.0
  %567 = vmatpush1.msra.mxu0 %v484
  %568 = vmatprep.subr.mxu0 0.0
  %569 = vmatpush1.msra.mxu0 %v485
  %570 = vmatprep.subr.mxu0 0.0
  %571 = vmatpush1.msra.mxu0 %v486
  %572 = vmatprep.subr.mxu0 0.0
  %573 = vmatpush1.msra.mxu0 %v487
  %574 = vmatprep.subr.mxu0 0.0
  %575 = vmatpush1.msra.mxu0 %v488
  %576 = vmatprep.subr.mxu0 0.0
  %577 = vmatpush1.msra.mxu0 %v489
  %578 = vmatprep.subr.mxu0 0.0
  %579 = vmatpush1.msra.mxu0 %v490
  %580 = vmatprep.subr.mxu0 0.0
  %581 = vmatpush1.msra.mxu0 %v491
  %582 = vmatprep.subr.mxu0 0.0
  %583 = vmatpush1.msra.mxu0 %v492
  %584 = vmatprep.subr.mxu0 0.0
  %585 = vmatpush1.msra.mxu0 %v493
  %586 = vmatprep.subr.mxu0 0.0
  %587 = vmatpush1.msra.mxu0 %v494
  %588 = vmatprep.subr.mxu0 0.0
  %589 = vmatpush1.msra.mxu0 %v495
  %590 = vmatprep.subr.mxu0 0.0
  %591 = vmatpush1.msra.mxu0 %v496
  %592 = vmatprep.subr.mxu0 0.0
  %593 = vmatpush1.msra.mxu0 %v497
  %594 = vmatprep.subr.mxu0 0.0
  %595 = vmatpush1.msra.mxu0 %v498
  %596 = vmatprep.mubr.f32.mxu0 %v15
  %597 = vmatmul.mubr.f32.gmra.mrb[0].mxu0 %v14
  %v598 = vpop.f32.mrb[0].mxu0
  %v599 = vadd.f32 0.0, %v598
  %v600 = vpop.f32.mrb[0].mxu0
  %601 = vdwg.mxu0
  %v602 = vmul.f32 %v599, 0.0625
  %vm603 = vcmask 130048
  %v605 = vsel %vm603, %v602, 0
  %607 = vmatprep.subr.mxu0 %v529
  %608 = vmatpush1.msra.mxu0 %v528
  %609 = vmatprep.subr.mxu0 %v531
  %610 = vmatpush1.msra.mxu0 %v530
  %611 = vmatprep.subr.mxu0 0.0
  %612 = vmatpush1.msra.mxu0 0.0
  %613 = vmatprep.subr.mxu0 0.0
  %614 = vmatpush1.msra.mxu0 0.0
  %615 = vmatprep.subr.mxu0 0.0
  %616 = vmatpush1.msra.mxu0 0.0
  %617 = vmatprep.subr.mxu0 0.0
  %618 = vmatpush1.msra.mxu0 0.0
  %619 = vmatprep.subr.mxu0 0.0
  %620 = vmatpush1.msra.mxu0 0.0
  %621 = vmatprep.subr.mxu0 0.0
  %622 = vmatpush1.msra.mxu0 0.0
  %623 = vmatprep.subr.mxu0 0.0
  %624 = vmatpush1.msra.mxu0 0.0
  %625 = vmatprep.subr.mxu0 0.0
  %626 = vmatpush1.msra.mxu0 0.0
  %627 = vmatprep.subr.mxu0 0.0
  %628 = vmatpush1.msra.mxu0 0.0
  %629 = vmatprep.subr.mxu0 0.0
  %630 = vmatpush1.msra.mxu0 0.0
  %631 = vmatprep.subr.mxu0 0.0
  %632 = vmatpush1.msra.mxu0 0.0
  %633 = vmatprep.subr.mxu0 0.0
  %634 = vmatpush1.msra.mxu0 0.0
  %635 = vmatprep.subr.mxu0 0.0
  %636 = vmatpush1.msra.mxu0 0.0
  %637 = vmatprep.subr.mxu0 0.0
  %638 = vmatpush1.msra.mxu0 0.0
  %639 = vmatprep.subr.mxu0 0.0
  %640 = vmatpush1.msra.mxu0 0.0
  %641 = vmatprep.subr.mxu0 0.0
  %642 = vmatpush1.msra.mxu0 0.0
  %643 = vmatprep.subr.mxu0 0.0
  %644 = vmatpush1.msra.mxu0 0.0
  %645 = vmatprep.subr.mxu0 0.0
  %646 = vmatpush1.msra.mxu0 0.0
  %647 = vmatprep.subr.mxu0 0.0
  %648 = vmatpush1.msra.mxu0 0.0
  %649 = vmatprep.subr.mxu0 0.0
  %650 = vmatpush1.msra.mxu0 0.0
  %651 = vmatprep.subr.mxu0 0.0
  %652 = vmatpush1.msra.mxu0 0.0
  %653 = vmatprep.subr.mxu0 0.0
  %654 = vmatpush1.msra.mxu0 0.0
  %655 = vmatprep.subr.mxu0 0.0
  %656 = vmatpush1.msra.mxu0 0.0
  %657 = vmatprep.subr.mxu0 0.0
  %658 = vmatpush1.msra.mxu0 0.0
  %659 = vmatprep.subr.mxu0 0.0
  %660 = vmatpush1.msra.mxu0 0.0
  %661 = vmatprep.subr.mxu0 0.0
  %662 = vmatpush1.msra.mxu0 0.0
  %663 = vmatprep.subr.mxu0 0.0
  %664 = vmatpush1.msra.mxu0 0.0
  %665 = vmatprep.subr.mxu0 0.0
  %666 = vmatpush1.msra.mxu0 0.0
  %667 = vmatprep.subr.mxu0 0.0
  %668 = vmatpush1.msra.mxu0 0.0
  %669 = vmatprep.subr.mxu0 0.0
  %670 = vmatpush1.msra.mxu0 0.0
  %671 = vmatprep.mubr.f32.mxu0 0.0
  %672 = vmatmul.mubr.f32.gmra.mrb[0].mxu0 %v605
  %v673 = vpop.f32.mrb[0].mxu0
  %v674 = vadd.f32 0.0, %v673
  %v675 = vpop.f32.mrb[0].mxu0
  %v676 = vadd.f32 0.0, %v675
  %677 = vdwg.mxu0
  %v678 = vsub.f32 %v14, %v674
  %v679 = vsub.f32 %v15, %v676
  %v680 = vmul.f32 %v678, %v678
  %v681 = vmul.f32 %v679, %v679
  %682 = vmatprep.subr.mxu0 0.0
  %683 = vmatpush1.msra.mxu0 %v467
  %684 = vmatprep.subr.mxu0 0.0
  %685 = vmatpush1.msra.mxu0 %v468
  %686 = vmatprep.subr.mxu0 0.0
  %687 = vmatpush1.msra.mxu0 %v469
  %688 = vmatprep.subr.mxu0 0.0
  %689 = vmatpush1.msra.mxu0 %v470
  %690 = vmatprep.subr.mxu0 0.0
  %691 = vmatpush1.msra.mxu0 %v471
  %692 = vmatprep.subr.mxu0 0.0
  %693 = vmatpush1.msra.mxu0 %v472
  %694 = vmatprep.subr.mxu0 0.0
  %695 = vmatpush1.msra.mxu0 %v473
  %696 = vmatprep.subr.mxu0 0.0
  %697 = vmatpush1.msra.mxu0 %v474
  %698 = vmatprep.subr.mxu0 0.0
  %699 = vmatpush1.msra.mxu0 %v475
  %700 = vmatprep.subr.mxu0 0.0
  %701 = vmatpush1.msra.mxu0 %v476
  %702 = vmatprep.subr.mxu0 0.0
  %703 = vmatpush1.msra.mxu0 %v477
  %704 = vmatprep.subr.mxu0 0.0
  %705 = vmatpush1.msra.mxu0 %v478
  %706 = vmatprep.subr.mxu0 0.0
  %707 = vmatpush1.msra.mxu0 %v479
  %708 = vmatprep.subr.mxu0 0.0
  %709 = vmatpush1.msra.mxu0 %v480
  %710 = vmatprep.subr.mxu0 0.0
  %711 = vmatpush1.msra.mxu0 %v481
  %712 = vmatprep.subr.mxu0 0.0
  %713 = vmatpush1.msra.mxu0 %v482
  %714 = vmatprep.subr.mxu0 0.0
  %715 = vmatpush1.msra.mxu0 %v483
  %716 = vmatprep.subr.mxu0 0.0
  %717 = vmatpush1.msra.mxu0 %v484
  %718 = vmatprep.subr.mxu0 0.0
  %719 = vmatpush1.msra.mxu0 %v485
  %720 = vmatprep.subr.mxu0 0.0
  %721 = vmatpush1.msra.mxu0 %v486
  %722 = vmatprep.subr.mxu0 0.0
  %723 = vmatpush1.msra.mxu0 %v487
  %724 = vmatprep.subr.mxu0 0.0
  %725 = vmatpush1.msra.mxu0 %v488
  %726 = vmatprep.subr.mxu0 0.0
  %727 = vmatpush1.msra.mxu0 %v489
  %728 = vmatprep.subr.mxu0 0.0
  %729 = vmatpush1.msra.mxu0 %v490
  %730 = vmatprep.subr.mxu0 0.0
  %731 = vmatpush1.msra.mxu0 %v491
  %732 = vmatprep.subr.mxu0 0.0
  %733 = vmatpush1.msra.mxu0 %v492
  %734 = vmatprep.subr.mxu0 0.0
  %735 = vmatpush1.msra.mxu0 %v493
  %736 = vmatprep.subr.mxu0 0.0
  %737 = vmatpush1.msra.mxu0 %v494
  %738 = vmatprep.subr.mxu0 0.0
  %739 = vmatpush1.msra.mxu0 %v495
  %740 = vmatprep.subr.mxu0 0.0
  %741 = vmatpush1.msra.mxu0 %v496
  %742 = vmatprep.subr.mxu0 0.0
  %743 = vmatpush1.msra.mxu0 %v497
  %744 = vmatprep.subr.mxu0 0.0
  %745 = vmatpush1.msra.mxu0 %v498
  %746 = vmatprep.mubr.f32.mxu0 %v681
  %747 = vmatmul.mubr.f32.gmra.mrb[0].mxu0 %v680
  %v748 = vpop.f32.mrb[0].mxu0
  %v749 = vadd.f32 0.0, %v748
  %v750 = vpop.f32.mrb[0].mxu0
  %751 = vdwg.mxu0
  %v752 = vmul.f32 %v749, 0.06666667
  %v753 = vadd.f32 %v752, 1e-05
  %v754 = vrsqrt.pop %v753
  %v755 = vld [vmem:[%s1] sm:$0xff]
  %757 = vset.pattern.permute.xlu0 0
  %758 = vperm.xlu0 %757, %v755
  %v759 = vpop.permute.xlu0 %758
  %v761 = vmul.f32 %v754, %v759
  %v763 = vsel %vm603, %v761, 0
  %765 = vmatprep.subr.mxu0 %v529
  %766 = vmatpush1.msra.mxu0 %v528
  %767 = vmatprep.subr.mxu0 %v531
  %768 = vmatpush1.msra.mxu0 %v530
  %769 = vmatprep.subr.mxu0 0.0
  %770 = vmatpush1.msra.mxu0 0.0
  %771 = vmatprep.subr.mxu0 0.0
  %772 = vmatpush1.msra.mxu0 0.0
  %773 = vmatprep.subr.mxu0 0.0
  %774 = vmatpush1.msra.mxu0 0.0
  %775 = vmatprep.subr.mxu0 0.0
  %776 = vmatpush1.msra.mxu0 0.0
  %777 = vmatprep.subr.mxu0 0.0
  %778 = vmatpush1.msra.mxu0 0.0
  %779 = vmatprep.subr.mxu0 0.0
  %780 = vmatpush1.msra.mxu0 0.0
  %781 = vmatprep.subr.mxu0 0.0
  %782 = vmatpush1.msra.mxu0 0.0
  %783 = vmatprep.subr.mxu0 0.0
  %784 = vmatpush1.msra.mxu0 0.0
  %785 = vmatprep.subr.mxu0 0.0
  %786 = vmatpush1.msra.mxu0 0.0
  %787 = vmatprep.subr.mxu0 0.0
  %788 = vmatpush1.msra.mxu0 0.0
  %789 = vmatprep.subr.mxu0 0.0
  %790 = vmatpush1.msra.mxu0 0.0
  %791 = vmatprep.subr.mxu0 0.0
  %792 = vmatpush1.msra.mxu0 0.0
  %793 = vmatprep.subr.mxu0 0.0
  %794 = vmatpush1.msra.mxu0 0.0
  %795 = vmatprep.subr.mxu0 0.0
  %796 = vmatpush1.msra.mxu0 0.0
  %797 = vmatprep.subr.mxu0 0.0
  %798 = vmatpush1.msra.mxu0 0.0
  %799 = vmatprep.subr.mxu0 0.0
  %800 = vmatpush1.msra.mxu0 0.0
  %801 = vmatprep.subr.mxu0 0.0
  %802 = vmatpush1.msra.mxu0 0.0
  %803 = vmatprep.subr.mxu0 0.0
  %804 = vmatpush1.msra.mxu0 0.0
  %805 = vmatprep.subr.mxu0 0.0
  %806 = vmatpush1.msra.mxu0 0.0
  %807 = vmatprep.subr.mxu0 0.0
  %808 = vmatpush1.msra.mxu0 0.0
  %809 = vmatprep.subr.mxu0 0.0
  %810 = vmatpush1.msra.mxu0 0.0
  %811 = vmatprep.subr.mxu0 0.0
  %812 = vmatpush1.msra.mxu0 0.0
  %813 = vmatprep.subr.mxu0 0.0
  %814 = vmatpush1.msra.mxu0 0.0
  %815 = vmatprep.subr.mxu0 0.0
  %816 = vmatpush1.msra.mxu0 0.0
  %817 = vmatprep.subr.mxu0 0.0
  %818 = vmatpush1.msra.mxu0 0.0
  %819 = vmatprep.subr.mxu0 0.0
  %820 = vmatpush1.msra.mxu0 0.0
  %821 = vmatprep.subr.mxu0 0.0
  %822 = vmatpush1.msra.mxu0 0.0
  %823 = vmatprep.subr.mxu0 0.0
  %824 = vmatpush1.msra.mxu0 0.0
  %825 = vmatprep.subr.mxu0 0.0
  %826 = vmatpush1.msra.mxu0 0.0
  %827 = vmatprep.subr.mxu0 0.0
  %828 = vmatpush1.msra.mxu0 0.0
  %829 = vmatprep.mubr.f32.mxu0 0.0
  %830 = vmatmul.mubr.f32.gmra.mrb[0].mxu0 %v763
  %v831 = vpop.f32.mrb[0].mxu0
  %v832 = vadd.f32 0.0, %v831
  %v833 = vpop.f32.mrb[0].mxu0
  %v834 = vadd.f32 0.0, %v833
  %835 = vdwg.mxu0
  %v836 = vmul.f32 %v678, %v832
  %v837 = vmul.f32 %v679, %v834
  %v838 = vld [vmem:[%s2] sm:$0xff]
  %840 = vset.pattern.permute.xlu0 0
  %841 = vperm.xlu0 %840, %v838
  %v842 = vpop.permute.xlu0 %841
  %v844 = vadd.f32 %v836, %v842
  %v845 = vadd.f32 %v837, %v842
  %846 = vst [vmem:[%s3] sm:$0xff] %v844
  %847 = vst [vmem:[%s3 + $0x8] sm:$0xff] %v845
  // Predicated region
  $region14: #{snorm.1} parent=0 // pred_check
    _
  $region15: #{snorm.1} parent=0 // pred_check_branch
    %849 = sbr.rel (0) target = $region17
  $region16: #{snorm.1} parent=0 // pred_region
    _
  $region17: #{snorm.1} parent=0 // pred_fallthru
    _
  // Predicated region
  $region18: #{snorm.1} parent=0 // pred_check
    _
  $region19: #{snorm.1} parent=0 // pred_check_branch
    %851 = sbr.rel (0) target = $region21
  $region20: #{snorm.1} parent=0 // pred_region
    _
  $region21: #{snorm.1} parent=0 // pred_fallthru
    _

</llo_original>
